<compile_context>
chip_gen: v6e
topology: v6e:2x2x1
jax: 0.10.0
libtpu: 0.0.40
codegen_flags: <defaults>
</compile_context>

<pallas_src>
import jax
import jax.numpy as jnp
import numpy as np
from jax import lax
from jax.experimental import pallas as pl
from jax.experimental.pallas import tpu as pltpu

# Structural constants from the module ("A photo of a X X X X person." + CLIP)
N_CTX = 4                                           # "X X X X"
N_CLS_CTX = 4                                       # learnable per-class tokens
TOTAL_LEN = 77                                      # CLIP tokenized length
PREFIX_LEN = N_CTX + 1                              # 5
SUFFIX_LEN = TOTAL_LEN - (N_CTX + 1 + N_CLS_CTX)    # 68


def _labeled_kernel(label_ref, prefix_ref, cls_ctx_ref, suffix_ref, out_ref):
    # label_ref:   (b_pad,)            int32 labels in SMEM (scalar prefetch)
    # prefix_ref:  (1, 5, D)           frozen prompt prefix (resident)
    # cls_ctx_ref: (num_class, 4, D)   full learnable table (resident in VMEM)
    # suffix_ref:  (1, 68, D)          frozen prompt suffix (resident)
    # out_ref:     (TILE, 77, D)       prompts for one batch tile
    tile = out_ref.shape[0]
    d = out_ref.shape[-1]
    base = pl.program_id(0) * tile

    # Frozen prefix / suffix: broadcast-store once for the whole tile
    # (direct slice stores -- no concatenate, no cross-sublane shuffle).
    out_ref[:, :PREFIX_LEN, :] = jnp.broadcast_to(
        prefix_ref[...], (tile, PREFIX_LEN, d))
    out_ref[:, PREFIX_LEN + N_CLS_CTX:, :] = jnp.broadcast_to(
        suffix_ref[...], (tile, SUFFIX_LEN, d))

    # Per-label gather from the resident cls_ctx table: only 4 rows written
    # per batch element.
    def body(n, carry):
        lab = label_ref[base + n]
        out_ref[pl.ds(n, 1), pl.ds(PREFIX_LEN, N_CLS_CTX), :] = \
            cls_ctx_ref[pl.ds(lab, 1)]
        return carry

    lax.fori_loop(0, tile, body, 0, unroll=(tile <= 16))


class PromptLearner:
    """JAX/Pallas re-implementation of the PyTorch PromptLearner module."""

    def __init__(self, num_class, ctx_dim=128, dtype=jnp.float32,
                 batch_tile=64, key=jax.random.PRNGKey(0)):
        k_emb, k_cls = jax.random.split(key)
        # Synthetic deterministic stand-in for token_embedding(clip.tokenize(...))
        embedding = (0.02 * jax.random.normal(
            k_emb, (1, TOTAL_LEN, ctx_dim), dtype=jnp.float32)).astype(dtype)
        self.token_prefix = embedding[:, :PREFIX_LEN, :]                  # (1, 5, D)
        self.token_suffix = embedding[:, PREFIX_LEN + N_CLS_CTX:, :]      # (1, 68, D)
        # cls_vectors ~ Normal(0, 0.02), shape (num_class, 4, D)
        self.cls_ctx = (0.02 * jax.random.normal(
            k_cls, (num_class, N_CLS_CTX, ctx_dim), dtype=jnp.float32)).astype(dtype)
        self.num_class = num_class
        self.ctx_dim = ctx_dim
        self.dtype = dtype
        self.batch_tile = batch_tile

    def __call__(self, label=None):
        D = self.ctx_dim

        if label is None:
            # Tiny one-off copy: Pallas launch overhead would dominate, XLA
            # fuses this trivially (per perf review).
            prefix2 = self.token_prefix[:, :2, :]
            suffix = self.token_suffix
            stuff = jnp.broadcast_to(self.token_suffix[:, -1, :],
                                     (N_CLS_CTX + 3, D))[None]
            return jnp.concatenate([prefix2, suffix, stuff], axis=1)

        # Clamp: out-of-range labels must never reach the VMEM gather.
        label = jnp.clip(label.astype(jnp.int32), 0, self.num_class - 1)
        b = label.shape[0]

        tile = min(self.batch_tile, b)
        b_pad = -(-b // tile) * tile
        if b_pad != b:
            label = jnp.concatenate(
                [label, jnp.zeros((b_pad - b,), jnp.int32)], axis=0)
        grid = (b_pad // tile,)

        itemsize = jnp.dtype(self.dtype).itemsize
        # Resident cls_ctx + double-buffered output tile + prefix/suffix.
        vmem_est = (self.num_class * N_CLS_CTX * D
                    + 2 * tile * TOTAL_LEN * D
                    + 2 * (PREFIX_LEN + SUFFIX_LEN) * D) * itemsize
        vmem_limit = int(min(48 * 1024 * 1024,
                             max(32 * 1024 * 1024, 4 * vmem_est)))

        out = pl.pallas_call(
            _labeled_kernel,
            out_shape=jax.ShapeDtypeStruct((b_pad, TOTAL_LEN, D), self.dtype),
            grid_spec=pltpu.PrefetchScalarGridSpec(
                num_scalar_prefetch=1,       # labels land in SMEM
                grid=grid,
                in_specs=[
                    # Constant index_maps -> blocks stay resident across grid.
                    pl.BlockSpec((1, PREFIX_LEN, D), lambda i, lab: (0, 0, 0)),
                    pl.BlockSpec((self.num_class, N_CLS_CTX, D),
                                 lambda i, lab: (0, 0, 0)),
                    pl.BlockSpec((1, SUFFIX_LEN, D), lambda i, lab: (0, 0, 0)),
                ],
                out_specs=pl.BlockSpec((tile, TOTAL_LEN, D),
                                       lambda i, lab: (i, 0, 0)),
            ),
            compiler_params=pltpu.CompilerParams(
                dimension_semantics=("parallel",),   # 2 TCs on v7x
                vmem_limit_bytes=vmem_limit),
        )(label, self.token_prefix, self.cls_ctx, self.token_suffix)

        return out[:b] if b_pad != b else out


if __name__ == "__main__":
    NUM_CLASS = 8
    CTX_DIM = 128
    BATCH = 2

    learner = PromptLearner(NUM_CLASS, ctx_dim=CTX_DIM, dtype=jnp.float32,
                            key=jax.random.PRNGKey(0))

    labels = jnp.array([3, 1], dtype=jnp.int32)

    # --- labeled branch (the hot path), single grid step ---
    prompts = learner(labels)
    prompts = jax.block_until_ready(prompts)
    assert prompts.shape == (BATCH, TOTAL_LEN, CTX_DIM)

    ref_labeled = jnp.concatenate(
        [jnp.broadcast_to(learner.token_prefix, (BATCH, PREFIX_LEN, CTX_DIM)),
         learner.cls_ctx[labels],
         jnp.broadcast_to(learner.token_suffix, (BATCH, SUFFIX_LEN, CTX_DIM))],
        axis=1)
    np.testing.assert_allclose(np.asarray(prompts), np.asarray(ref_labeled),
                               rtol=0, atol=0)

    # --- labeled branch with batch padding + multi-step grid ---
    learner_small_tile = PromptLearner(NUM_CLASS, ctx_dim=CTX_DIM,
                                       dtype=jnp.float32, batch_tile=4,
                                       key=jax.random.PRNGKey(0))
    labels5 = jnp.array([7, 0, 2, 5, 4], dtype=jnp.int32)
    prompts5 = jax.block_until_ready(learner_small_tile(labels5))
    assert prompts5.shape == (5, TOTAL_LEN, CTX_DIM)
    ref5 = jnp.concatenate(
        [jnp.broadcast_to(learner_small_tile.token_prefix,
                          (5, PREFIX_LEN, CTX_DIM)),
         learner_small_tile.cls_ctx[labels5],
         jnp.broadcast_to(learner_small_tile.token_suffix,
                          (5, SUFFIX_LEN, CTX_DIM))],
        axis=1)
    np.testing.assert_allclose(np.asarray(prompts5), np.asarray(ref5),
                               rtol=0, atol=0)

    # --- label == None branch ---
    prompts_none = jax.block_until_ready(learner(None))
    assert prompts_none.shape == (1, TOTAL_LEN, CTX_DIM)
    ref_none = jnp.concatenate(
        [learner.token_prefix[:, :2, :],
         learner.token_suffix,
         jnp.broadcast_to(learner.token_suffix[:, -1, :],
                          (N_CLS_CTX + 3, CTX_DIM))[None]],
        axis=1)
    np.testing.assert_allclose(np.asarray(prompts_none), np.asarray(ref_none),
                               rtol=0, atol=0)

    print("KERNEL_OK")
</pallas_src>

<mosaic_0001>
module attributes {stable_mosaic.version = 11 : i64} {
  func.func @_labeled_kernel(%arg0: i32, %arg1: memref<2xi32, #tpu.memory_space<smem>>, %arg2: memref<1x5x128xf32, #tpu.memory_space<vmem>>, %arg3: memref<8x4x128xf32, #tpu.memory_space<vmem>>, %arg4: memref<1x68x128xf32, #tpu.memory_space<vmem>>, %arg5: memref<2x77x128xf32, #tpu.memory_space<vmem>>) attributes {dimension_semantics = [#tpu.dimension_semantics<parallel>], iteration_bounds = array<i64: 1>, scalar_prefetch = 1 : i64, scratch_operands = 0 : i64, tpu.core_type = #tpu.core_type<tc>, window_params = [{pipeline_mode = #tpu.pipeline_mode<synchronous>, transform_indices = @transform_0, window_bounds = array<i64: 1, 5, 128>}, {pipeline_mode = #tpu.pipeline_mode<synchronous>, transform_indices = @transform_1, window_bounds = array<i64: 8, 4, 128>}, {pipeline_mode = #tpu.pipeline_mode<synchronous>, transform_indices = @transform_2, window_bounds = array<i64: 1, 68, 128>}, {transform_indices = @transform_3, window_bounds = array<i64: 2, 77, 128>}]} {
    %c2_i32 = arith.constant 2 : i32
    %0 = arith.muli %arg0, %c2_i32 : i32
    %c0 = arith.constant 0 : index
    %c0_0 = arith.constant 0 : index
    %c0_1 = arith.constant 0 : index
    %1 = vector.load %arg2[%c0, %c0_0, %c0_1] : memref<1x5x128xf32, #tpu.memory_space<vmem>>, vector<1x5x128xf32>
    %2 = vector.shape_cast %1 : vector<1x5x128xf32> to vector<1x5x128xf32>
    %3 = vector.broadcast %2 : vector<1x5x128xf32> to vector<2x5x128xf32>
    %c0_2 = arith.constant 0 : index
    %c0_3 = arith.constant 0 : index
    %c0_4 = arith.constant 0 : index
    %4 = vector.load %arg5[%c0_2, %c0_3, %c0_4] : memref<2x77x128xf32, #tpu.memory_space<vmem>>, vector<2x5x128xf32>
    tpu.vector_store %arg5[%c0_2, %c0_3, %c0_4], %3 {strides = array<i32>} : memref<2x77x128xf32, #tpu.memory_space<vmem>>, vector<2x5x128xf32>,
    %c0_5 = arith.constant 0 : index
    %c0_6 = arith.constant 0 : index
    %c0_7 = arith.constant 0 : index
    %5 = vector.load %arg4[%c0_5, %c0_6, %c0_7] : memref<1x68x128xf32, #tpu.memory_space<vmem>>, vector<1x68x128xf32>
    %6 = vector.shape_cast %5 : vector<1x68x128xf32> to vector<1x68x128xf32>
    %7 = vector.broadcast %6 : vector<1x68x128xf32> to vector<2x68x128xf32>
    %c0_8 = arith.constant 0 : index
    %c9 = arith.constant 9 : index
    %c0_9 = arith.constant 0 : index
    %8 = vector.load %arg5[%c0_8, %c9, %c0_9] : memref<2x77x128xf32, #tpu.memory_space<vmem>>, vector<2x68x128xf32>
    tpu.vector_store %arg5[%c0_8, %c9, %c0_9], %7 {strides = array<i32>} : memref<2x77x128xf32, #tpu.memory_space<vmem>>, vector<2x68x128xf32>,
    %c0_i32 = arith.constant 0 : i32
    %9 = arith.addi %0, %c0_i32 : i32
    %10 = arith.index_cast %9 : i32 to index
    %11 = memref.load %arg1[%10] : memref<2xi32, #tpu.memory_space<smem>>
    %12 = arith.index_cast %11 : i32 to index
    %c0_10 = arith.constant 0 : index
    %c0_11 = arith.constant 0 : index
    %13 = vector.load %arg3[%12, %c0_10, %c0_11] : memref<8x4x128xf32, #tpu.memory_space<vmem>>, vector<1x4x128xf32>
    %14 = arith.index_cast %c0_i32 : i32 to index
    %c5 = arith.constant 5 : index
    %c0_12 = arith.constant 0 : index
    %15 = vector.load %arg5[%14, %c5, %c0_12] : memref<2x77x128xf32, #tpu.memory_space<vmem>>, vector<1x4x128xf32>
    tpu.vector_store %arg5[%14, %c5, %c0_12], %13 {strides = array<i32>} : memref<2x77x128xf32, #tpu.memory_space<vmem>>, vector<1x4x128xf32>,
    %c1_i32 = arith.constant 1 : i32
    %16 = arith.addi %0, %c1_i32 : i32
    %17 = arith.index_cast %16 : i32 to index
    %18 = memref.load %arg1[%17] : memref<2xi32, #tpu.memory_space<smem>>
    %19 = arith.index_cast %18 : i32 to index
    %c0_13 = arith.constant 0 : index
    %c0_14 = arith.constant 0 : index
    %20 = vector.load %arg3[%19, %c0_13, %c0_14] : memref<8x4x128xf32, #tpu.memory_space<vmem>>, vector<1x4x128xf32>
    %21 = arith.index_cast %c1_i32 : i32 to index
    %c5_15 = arith.constant 5 : index
    %c0_16 = arith.constant 0 : index
    %22 = vector.load %arg5[%21, %c5_15, %c0_16] : memref<2x77x128xf32, #tpu.memory_space<vmem>>, vector<1x4x128xf32>
    tpu.vector_store %arg5[%21, %c5_15, %c0_16], %20 {strides = array<i32>} : memref<2x77x128xf32, #tpu.memory_space<vmem>>, vector<1x4x128xf32>,
    %c2_i32_17 = arith.constant 2 : i32
    return
  }
  func.func @transform_0(%arg0: i32, %arg1: memref<2xi32, #tpu.memory_space<smem>>) -> (i32, i32, i32) {
    %c0_i32 = arith.constant 0 : i32
    %c0_i32_0 = arith.constant 0 : i32
    %c0_i32_1 = arith.constant 0 : i32
    %c0_i32_2 = arith.constant 0 : i32
    return %c0_i32, %c0_i32_0, %c0_i32_1 : i32, i32, i32
  }
  func.func @transform_1(%arg0: i32, %arg1: memref<2xi32, #tpu.memory_space<smem>>) -> (i32, i32, i32) {
    %c0_i32 = arith.constant 0 : i32
    %c0_i32_0 = arith.constant 0 : i32
    %c0_i32_1 = arith.constant 0 : i32
    %c0_i32_2 = arith.constant 0 : i32
    return %c0_i32, %c0_i32_0, %c0_i32_1 : i32, i32, i32
  }
  func.func @transform_2(%arg0: i32, %arg1: memref<2xi32, #tpu.memory_space<smem>>) -> (i32, i32, i32) {
    %c0_i32 = arith.constant 0 : i32
    %c0_i32_0 = arith.constant 0 : i32
    %c0_i32_1 = arith.constant 0 : i32
    %c0_i32_2 = arith.constant 0 : i32
    return %c0_i32, %c0_i32_0, %c0_i32_1 : i32, i32, i32
  }
  func.func @transform_3(%arg0: i32, %arg1: memref<2xi32, #tpu.memory_space<smem>>) -> (i32, i32, i32) {
    %c0_i32 = arith.constant 0 : i32
    %c0_i32_0 = arith.constant 0 : i32
    %c0_i32_1 = arith.constant 0 : i32
    return %arg0, %c0_i32, %c0_i32_0 : i32, i32, i32
  }
}

</mosaic_0001>

<llo_original>
// kernel: tpu_custom_call.1
$region0: #{tpu_custom_call.1}
  #allocation0 [shape = 'u32[]', space=smem, size = 0x4, offset = 0x4, fixed_abs, tag = 'smem constant byte address 0x4 - core index']
  #allocation1 [shape = 'u32[144,128]{1,0:T(1,128)}', space=vmem, size = 0x12000, scoped, tag = 'internal scratch']
  #allocation2 [shape = 's32[1]{0}', space=sflag, size = 0x4, scoped, tag = 'scoped memory for tpu_custom_call.1']
  #allocation3 [shape = 'u8[512]{0}', space=smem, size = 0x200, scoped, tag = 'prefetched SMEM operand 0']
  %s0 = inlined_call_operand.vmem [shape: s32[2], index: 0, kind: input, shape index: {}]
  %s1 = inlined_call_operand.vmem [shape: f32[1,5,128], index: 1, kind: input, shape index: {}]
  %s2 = inlined_call_operand.vmem [shape: f32[8,4,128], index: 2, kind: input, shape index: {}]
  %s3 = inlined_call_operand.vmem [shape: f32[1,68,128], index: 3, kind: input, shape index: {}]
  %s4 = inlined_call_operand.vmem [shape: f32[2,77,128], index: 4, kind: output, shape index: {}]
  %s5 = sld [smem:[#allocation0]]
  $region22: #{tpu_custom_call.1} parent=0
    _
  %s7 = ssub.s32 1, %s5
  %s8 = scalar_select 0, %s7, %s5
  %s9 = sshll.u32 %s0, 4
  %s10 = int_to_ptr.vmem [resolvable:$true] %s9
  %12 = dma.vmem_to_smem %s10, 16, [#allocation3], [#allocation2]
  %13 = dma.done [#allocation2], 16
  %14 = sfence
  // Predicated region
  $region2: #{tpu_custom_call.1} parent=0 // pred_check
    _
  $region3: #{tpu_custom_call.1} parent=0 // pred_check_branch
    %16 = sbr.rel (0) target = $region5
  $region4: #{tpu_custom_call.1} parent=0 // pred_region
    _
  $region5: #{tpu_custom_call.1} parent=0 // pred_fallthru
    _
  // Predicated region
  $region6: #{tpu_custom_call.1} parent=0 // pred_check
    _
  $region7: #{tpu_custom_call.1} parent=0 // pred_check_branch
    %18 = sbr.rel (0) target = $region9
  $region8: #{tpu_custom_call.1} parent=0 // pred_region
    _
  $region9: #{tpu_custom_call.1} parent=0 // pred_fallthru
    _
  // Predicated region
  $region10: #{tpu_custom_call.1} parent=0 // pred_check
    _
  $region11: #{tpu_custom_call.1} parent=0 // pred_check_branch
    %20 = sbr.rel (0) target = $region13
  $region12: #{tpu_custom_call.1} parent=0 // pred_region
    _
  $region13: #{tpu_custom_call.1} parent=0 // pred_fallthru
    _
  %s21 = smul.u32 0, 2
  %v22 = vld [vmem:[%s1] sm:$0x1f]
  %23 = vst [vmem:[%s4] sm:$0x1f] %v22
  %24 = vst [vmem:[%s4 + $0x50] sm:$0x1f] %v22
  %v25 = vld [vmem:[%s3] sm:$0xff]
  %v26 = vld [vmem:[%s3 + $0x8] sm:$0xff]
  %v27 = vld [vmem:[%s3 + $0x10] sm:$0xff]
  %v28 = vld [vmem:[%s3 + $0x18] sm:$0xff]
  %v29 = vld [vmem:[%s3 + $0x20] sm:$0xff]
  %v30 = vld [vmem:[%s3 + $0x28] sm:$0xff]
  %v31 = vld [vmem:[%s3 + $0x30] sm:$0xff]
  %v32 = vld [vmem:[%s3 + $0x38] sm:$0xff]
  %v33 = vld [vmem:[%s3 + $0x40] sm:$0xf]
  %34 = vst [vmem:[%s4 + $0x9] sm:$0xff] %v25
  %35 = vst [vmem:[%s4 + $0x11] sm:$0xff] %v26
  %36 = vst [vmem:[%s4 + $0x19] sm:$0xff] %v27
  %37 = vst [vmem:[%s4 + $0x21] sm:$0xff] %v28
  %38 = vst [vmem:[%s4 + $0x29] sm:$0xff] %v29
  %39 = vst [vmem:[%s4 + $0x31] sm:$0xff] %v30
  %40 = vst [vmem:[%s4 + $0x39] sm:$0xff] %v31
  %41 = vst [vmem:[%s4 + $0x41] sm:$0xff] %v32
  %42 = vst [vmem:[%s4 + $0x49] sm:$0xf] %v33
  %43 = vst [vmem:[%s4 + $0x59] sm:$0xff] %v25
  %44 = vst [vmem:[%s4 + $0x61] sm:$0xff] %v26
  %45 = vst [vmem:[%s4 + $0x69] sm:$0xff] %v27
  %46 = vst [vmem:[%s4 + $0x71] sm:$0xff] %v28
  %47 = vst [vmem:[%s4 + $0x79] sm:$0xff] %v29
  %48 = vst [vmem:[%s4 + $0x81] sm:$0xff] %v30
  %49 = vst [vmem:[%s4 + $0x89] sm:$0xff] %v31
  %50 = vst [vmem:[%s4 + $0x91] sm:$0xff] %v32
  %51 = vst [vmem:[%s4 + $0x99] sm:$0xf] %v33
  %s52 = sld [smem:[#allocation3 + %s21]]
  %s53 = smul.u32 %s52, 4
  %s54 = scalar_lea.vmem %s2, %s53
  %v55 = vld [vmem:[%s54] sm:$0xf]
  %56 = vst [vmem:[%s4 + $0x5] sm:$0xf] %v55
  %s57 = sadd.s32 %s21, 1
  %s58 = sld [smem:[#allocation3 + %s57]]
  %s59 = smul.u32 %s58, 4
  %s60 = scalar_lea.vmem %s2, %s59
  %v61 = vld [vmem:[%s60] sm:$0xf]
  %s62 = scalar_lea.vmem %s4, 80
  %63 = vst [vmem:[%s62 + $0x5] sm:$0xf] %v61
  // Predicated region
  $region14: #{tpu_custom_call.1} parent=0 // pred_check
    _
  $region15: #{tpu_custom_call.1} parent=0 // pred_check_branch
    %65 = sbr.rel (0) target = $region17
  $region16: #{tpu_custom_call.1} parent=0 // pred_region
    _
  $region17: #{tpu_custom_call.1} parent=0 // pred_fallthru
    _
  // Predicated region
  $region18: #{tpu_custom_call.1} parent=0 // pred_check
    _
  $region19: #{tpu_custom_call.1} parent=0 // pred_check_branch
    %67 = sbr.rel (0) target = $region21
  $region20: #{tpu_custom_call.1} parent=0 // pred_region
    _
  $region21: #{tpu_custom_call.1} parent=0 // pred_fallthru
    _

</llo_original>
